<compile_context>
chip_gen: v7x
topology: tpu7x:2x2x1
jax: 0.10.0
libtpu: 0.0.40
codegen_flags: <defaults>
</compile_context>

<pallas_src>
import functools

import jax
import jax.numpy as jnp
from jax.experimental import pallas as pl
from jax.experimental.pallas import tpu as pltpu

EPS = 1e-5  # PyTorch BatchNorm1d default eps


def _round_up(v, m):
    return (v + m - 1) // m * m


def resnet_block_kernel(x_ref, w1_ref, b1_ref, g1_ref, be1_ref,
                        w2_ref, b2_ref, g2_ref, be2_ref,
                        out_ref, stk_ref, *, seg_len, c_in, c_pad):
    # x_ref   : (C, N*L)       input, batch folded into the lane axis
    # w*_ref  : (O, 3*c_pad)   conv weights, taps stacked along the contraction dim
    # b*, g*, be* : (O, 1)     conv bias / BN gamma / BN beta
    # out_ref : (O, N*L)
    # stk_ref : (3*c_pad, N*L) im2col scratch, reused by both convs
    C = c_in
    Cp = c_pad
    NL = x_ref.shape[1]
    L = seg_len
    inv_nl = 1.0 / NL

    # ---- boundary / pad-row kill mask (computed once, reused by both convs) ----
    rows = jax.lax.broadcasted_iota(jnp.int32, (3 * Cp, NL), 0)
    cols = jax.lax.broadcasted_iota(jnp.int32, (3 * Cp, NL), 1).astype(jnp.float32)
    seg = jnp.floor((cols + 0.5) * (1.0 / L))
    pos = cols - seg * L                                 # column index within its batch segment
    pad_rows = (((rows >= C) & (rows < Cp)) |
                ((rows >= Cp + C) & (rows < 2 * Cp)) |
                (rows >= 2 * Cp + C))
    left_edge = (rows < Cp) & (pos < 0.5)                # tap k=0 reads x[l-1]; l==0   -> pad zero
    right_edge = (rows >= 2 * Cp) & (pos > L - 1.5)      # tap k=2 reads x[l+1]; l==L-1 -> pad zero
    kill = pad_rows | left_edge | right_edge

    def conv_bn(v, w_ref, b_ref, g_ref, be_ref):
        # depth-3 im2col via shifted static-slice stores into the shared scratch
        stk_ref[0:C, 1:NL] = v[:, 0:NL - 1]                   # tap 0 : x[l-1]
        stk_ref[Cp:Cp + C, :] = v                             # tap 1 : x[l]
        stk_ref[2 * Cp:2 * Cp + C, 0:NL - 1] = v[:, 1:NL]     # tap 2 : x[l+1]
        stacked = jnp.where(kill, 0.0, stk_ref[...])
        h = jnp.dot(w_ref[...], stacked,
                    preferred_element_type=jnp.float32) + b_ref[...]
        # training-mode BatchNorm1d: batch stats over (N, L), single pass
        s = jnp.sum(h, axis=1, keepdims=True)
        ss = jnp.sum(h * h, axis=1, keepdims=True)
        mu = s * inv_nl
        var = ss * inv_nl - mu * mu
        return (h - mu) * jax.lax.rsqrt(var + EPS) * g_ref[...] + be_ref[...]

    x0 = x_ref[...]
    a1 = jnp.maximum(conv_bn(x0, w1_ref, b1_ref, g1_ref, be1_ref), 0.0)
    a2 = conv_bn(a1, w2_ref, b2_ref, g2_ref, be2_ref)
    out_ref[...] = jnp.maximum(a2 + x0, 0.0)


def resnet_block(x, w1, b1, g1, be1, w2, b2, g2, be2):
    """x: (N, C, L) f32; w*: (O, C, 3); b*, g*, be*: (O,). Returns (N, O, L)."""
    N, C, L = x.shape
    O = w1.shape[0]
    assert C == O, "residual add requires in_channels == out_channels"
    NL = N * L
    Cp = _round_up(C, 8)   # sublane-aligned section stride in the im2col scratch

    # host-side layout plumbing only (no padding, no extra compute):
    # fold batch into lanes and pre-stack the conv taps along the contraction dim
    x2d = jnp.transpose(x, (1, 0, 2)).reshape(C, NL)

    def stack_w(w):
        wt = jnp.transpose(w, (2, 0, 1))                        # (3, O, C)
        wt = jnp.pad(wt, ((0, 0), (0, 0), (0, Cp - C)))         # (3, O, Cp)
        return jnp.concatenate([wt[0], wt[1], wt[2]], axis=1)   # (O, 3*Cp)

    w1s, w2s = stack_w(w1), stack_w(w2)
    b1c, b2c = b1.reshape(O, 1), b2.reshape(O, 1)
    g1c, be1c = g1.reshape(O, 1), be1.reshape(O, 1)
    g2c, be2c = g2.reshape(O, 1), be2.reshape(O, 1)

    vmem = pl.BlockSpec(memory_space=pltpu.MemorySpace.VMEM)
    kernel = functools.partial(resnet_block_kernel, seg_len=L, c_in=C, c_pad=Cp)
    out2d = pl.pallas_call(
        kernel,
        out_shape=jax.ShapeDtypeStruct((O, NL), jnp.float32),
        in_specs=[vmem] * 9,
        out_specs=vmem,
        scratch_shapes=[pltpu.VMEM((3 * Cp, NL), jnp.float32)],
    )(x2d, w1s, b1c, g1c, be1c, w2s, b2c, g2c, be2c)

    # back to the PyTorch (N, O, L) layout
    return jnp.transpose(out2d.reshape(O, N, L), (1, 0, 2))


# ------------------------- plain-JAX reference -------------------------------
def _ref(x, w1, b1, g1, be1, w2, b2, g2, be2):
    L = x.shape[2]

    def conv1d(h, w, b):
        hp = jnp.pad(h, ((0, 0), (0, 0), (1, 1)))
        y = jnp.zeros((h.shape[0], w.shape[0], L), jnp.float32)
        for k in range(3):
            y = y + jnp.einsum('oc,ncl->nol', w[:, :, k], hp[:, :, k:k + L])
        return y + b[None, :, None]

    def bn(h, g, be):
        mu = h.mean(axis=(0, 2), keepdims=True)
        var = ((h - mu) ** 2).mean(axis=(0, 2), keepdims=True)
        return (h - mu) / jnp.sqrt(var + EPS) * g[None, :, None] + be[None, :, None]

    h = jax.nn.relu(bn(conv1d(x, w1, b1), g1, be1))
    h = bn(conv1d(h, w2, b2), g2, be2)
    return jax.nn.relu(h + x)


if __name__ == "__main__":
    N, C, L = 2, 4, 16          # batch, channels (in == out), sequence length
    key = jax.random.PRNGKey(0)
    kx, k1w, k1b, k2w, k2b = jax.random.split(key, 5)

    x = jax.random.normal(kx, (N, C, L), dtype=jnp.float32)

    bound = 1.0 / jnp.sqrt(C * 3.0)
    w1 = jax.random.uniform(k1w, (C, C, 3), jnp.float32, -bound, bound)
    b1 = jax.random.uniform(k1b, (C,), jnp.float32, -bound, bound)
    w2 = jax.random.uniform(k2w, (C, C, 3), jnp.float32, -bound, bound)
    b2 = jax.random.uniform(k2b, (C,), jnp.float32, -bound, bound)
    # BatchNorm default init: gamma = 1, beta = 0
    g1 = jnp.ones((C,), jnp.float32); be1 = jnp.zeros((C,), jnp.float32)
    g2 = jnp.ones((C,), jnp.float32); be2 = jnp.zeros((C,), jnp.float32)

    out = resnet_block(x, w1, b1, g1, be1, w2, b2, g2, be2)
    out = jax.block_until_ready(out)

    ref = _ref(x, w1, b1, g1, be1, w2, b2, g2, be2)
    assert out.shape == (N, C, L)
    assert jnp.allclose(out, ref, rtol=1e-3, atol=1e-3), "mismatch vs reference"
    print("KERNEL_OK")
</pallas_src>

<mosaic_0001>
module attributes {stable_mosaic.version = 11 : i64} {
  func.func @resnet_block_kernel(%arg0: memref<4x32xf32, #tpu.memory_space<vmem>>, %arg1: memref<4x24xf32, #tpu.memory_space<vmem>>, %arg2: memref<4x1xf32, #tpu.memory_space<vmem>>, %arg3: memref<4x1xf32, #tpu.memory_space<vmem>>, %arg4: memref<4x1xf32, #tpu.memory_space<vmem>>, %arg5: memref<4x24xf32, #tpu.memory_space<vmem>>, %arg6: memref<4x1xf32, #tpu.memory_space<vmem>>, %arg7: memref<4x1xf32, #tpu.memory_space<vmem>>, %arg8: memref<4x1xf32, #tpu.memory_space<vmem>>, %arg9: memref<4x32xf32, #tpu.memory_space<vmem>>, %arg10: memref<24x32xf32, #tpu.memory_space<vmem>>) attributes {dimension_semantics = [], scalar_prefetch = 0 : i64, scratch_operands = 1 : i64, tpu.core_type = #tpu.core_type<tc>} {
    %0 = tpu.iota {dimensions = array<i32: 0>} : vector<24x32xi32>
    %1 = tpu.iota {dimensions = array<i32: 1>} : vector<24x32xi32>
    %2 = arith.sitofp %1 : vector<24x32xi32> to vector<24x32xf32>
    %cst = arith.constant 5.000000e-01 : f32
    %3 = vector.broadcast %cst : f32 to vector<24x32xf32>
    %4 = arith.addf %2, %3 : vector<24x32xf32>
    %cst_0 = arith.constant 6.250000e-02 : f32
    %5 = vector.broadcast %cst_0 : f32 to vector<24x32xf32>
    %6 = arith.mulf %4, %5 : vector<24x32xf32>
    %7 = math.floor %6 : vector<24x32xf32>
    %cst_1 = arith.constant 1.600000e+01 : f32
    %8 = vector.broadcast %cst_1 : f32 to vector<24x32xf32>
    %9 = arith.mulf %7, %8 : vector<24x32xf32>
    %10 = arith.subf %2, %9 : vector<24x32xf32>
    %c4_i32 = arith.constant 4 : i32
    %11 = vector.broadcast %c4_i32 : i32 to vector<24x32xi32>
    %12 = arith.cmpi sge, %0, %11 : vector<24x32xi32>
    %c8_i32 = arith.constant 8 : i32
    %13 = vector.broadcast %c8_i32 : i32 to vector<24x32xi32>
    %14 = arith.cmpi slt, %0, %13 : vector<24x32xi32>
    %15 = arith.andi %12, %14 : vector<24x32xi1>
    %c12_i32 = arith.constant 12 : i32
    %16 = vector.broadcast %c12_i32 : i32 to vector<24x32xi32>
    %17 = arith.cmpi sge, %0, %16 : vector<24x32xi32>
    %c16_i32 = arith.constant 16 : i32
    %18 = vector.broadcast %c16_i32 : i32 to vector<24x32xi32>
    %19 = arith.cmpi slt, %0, %18 : vector<24x32xi32>
    %20 = arith.andi %17, %19 : vector<24x32xi1>
    %21 = arith.ori %15, %20 : vector<24x32xi1>
    %c20_i32 = arith.constant 20 : i32
    %22 = vector.broadcast %c20_i32 : i32 to vector<24x32xi32>
    %23 = arith.cmpi sge, %0, %22 : vector<24x32xi32>
    %24 = arith.ori %21, %23 : vector<24x32xi1>
    %c8_i32_2 = arith.constant 8 : i32
    %25 = vector.broadcast %c8_i32_2 : i32 to vector<24x32xi32>
    %26 = arith.cmpi slt, %0, %25 : vector<24x32xi32>
    %cst_3 = arith.constant 5.000000e-01 : f32
    %27 = vector.broadcast %cst_3 : f32 to vector<24x32xf32>
    %28 = arith.cmpf olt, %10, %27 : vector<24x32xf32>
    %29 = arith.andi %26, %28 : vector<24x32xi1>
    %c16_i32_4 = arith.constant 16 : i32
    %30 = vector.broadcast %c16_i32_4 : i32 to vector<24x32xi32>
    %31 = arith.cmpi sge, %0, %30 : vector<24x32xi32>
    %cst_5 = arith.constant 1.450000e+01 : f32
    %32 = vector.broadcast %cst_5 : f32 to vector<24x32xf32>
    %33 = arith.cmpf ogt, %10, %32 : vector<24x32xf32>
    %34 = arith.andi %31, %33 : vector<24x32xi1>
    %35 = arith.ori %24, %29 : vector<24x32xi1>
    %36 = arith.ori %35, %34 : vector<24x32xi1>
    %c0 = arith.constant 0 : index
    %c0_6 = arith.constant 0 : index
    %37 = vector.load %arg0[%c0, %c0_6] : memref<4x32xf32, #tpu.memory_space<vmem>>, vector<4x32xf32>
    %38 = vector.extract_strided_slice %37 {offsets = [0, 0], sizes = [4, 31], strides = [1, 1]} : vector<4x32xf32> to vector<4x31xf32>
    %c0_7 = arith.constant 0 : index
    %c1 = arith.constant 1 : index
    %39 = vector.load %arg10[%c0_7, %c1] : memref<24x32xf32, #tpu.memory_space<vmem>>, vector<4x31xf32>
    tpu.vector_store %arg10[%c0_7, %c1], %38 {strides = array<i32>} : memref<24x32xf32, #tpu.memory_space<vmem>>, vector<4x31xf32>,
    %c8 = arith.constant 8 : index
    %c0_8 = arith.constant 0 : index
    %40 = vector.load %arg10[%c8, %c0_8] : memref<24x32xf32, #tpu.memory_space<vmem>>, vector<4x32xf32>
    tpu.vector_store %arg10[%c8, %c0_8], %37 {strides = array<i32>} : memref<24x32xf32, #tpu.memory_space<vmem>>, vector<4x32xf32>,
    %41 = vector.extract_strided_slice %37 {offsets = [0, 1], sizes = [4, 31], strides = [1, 1]} : vector<4x32xf32> to vector<4x31xf32>
    %c16 = arith.constant 16 : index
    %c0_9 = arith.constant 0 : index
    %42 = vector.load %arg10[%c16, %c0_9] : memref<24x32xf32, #tpu.memory_space<vmem>>, vector<4x31xf32>
    tpu.vector_store %arg10[%c16, %c0_9], %41 {strides = array<i32>} : memref<24x32xf32, #tpu.memory_space<vmem>>, vector<4x31xf32>,
    %c0_10 = arith.constant 0 : index
    %c0_11 = arith.constant 0 : index
    %43 = vector.load %arg10[%c0_10, %c0_11] : memref<24x32xf32, #tpu.memory_space<vmem>>, vector<24x32xf32>
    %cst_12 = arith.constant 0.000000e+00 : f32
    %44 = vector.broadcast %cst_12 : f32 to vector<24x32xf32>
    %45 = arith.select %36, %44, %43 : vector<24x32xi1>, vector<24x32xf32>
    %c0_13 = arith.constant 0 : index
    %c0_14 = arith.constant 0 : index
    %46 = vector.load %arg1[%c0_13, %c0_14] : memref<4x24xf32, #tpu.memory_space<vmem>>, vector<4x24xf32>
    %cst_15 = arith.constant dense<0.000000e+00> : vector<4x32xf32>
    %47 = tpu.matmul %46, %45, %cst_15 {dimension_numbers = #tpu.dot_dimension_numbers<[1], [0], [0], [1], [0, 0, 1, 1], [], []>} : vector<4x24xf32>, vector<24x32xf32>, vector<4x32xf32> -> vector<4x32xf32>
    %c0_16 = arith.constant 0 : index
    %c0_17 = arith.constant 0 : index
    %48 = vector.load %arg2[%c0_16, %c0_17] : memref<4x1xf32, #tpu.memory_space<vmem>>, vector<4x1xf32>
    %49 = vector.broadcast %48 : vector<4x1xf32> to vector<4x32xf32>
    %50 = arith.addf %47, %49 : vector<4x32xf32>
    %cst_18 = arith.constant dense<0.000000e+00> : vector<4xf32>
    %51 = vector.multi_reduction <add>, %50, %cst_18 [1] : vector<4x32xf32> to vector<4xf32>
    %52 = vector.shape_cast %51 : vector<4xf32> to vector<4x1xf32>
    %53 = arith.mulf %50, %50 : vector<4x32xf32>
    %cst_19 = arith.constant dense<0.000000e+00> : vector<4xf32>
    %54 = vector.multi_reduction <add>, %53, %cst_19 [1] : vector<4x32xf32> to vector<4xf32>
    %55 = vector.shape_cast %54 : vector<4xf32> to vector<4x1xf32>
    %cst_20 = arith.constant 3.125000e-02 : f32
    %56 = vector.broadcast %cst_20 : f32 to vector<4x1xf32>
    %57 = arith.mulf %52, %56 : vector<4x1xf32>
    %cst_21 = arith.constant 3.125000e-02 : f32
    %58 = vector.broadcast %cst_21 : f32 to vector<4x1xf32>
    %59 = arith.mulf %55, %58 : vector<4x1xf32>
    %60 = arith.mulf %57, %57 : vector<4x1xf32>
    %61 = arith.subf %59, %60 : vector<4x1xf32>
    %62 = vector.broadcast %57 : vector<4x1xf32> to vector<4x32xf32>
    %63 = arith.subf %50, %62 : vector<4x32xf32>
    %cst_22 = arith.constant 9.99999974E-6 : f32
    %64 = vector.broadcast %cst_22 : f32 to vector<4x1xf32>
    %65 = arith.addf %61, %64 : vector<4x1xf32>
    %66 = math.rsqrt %65 : vector<4x1xf32>
    %67 = vector.broadcast %66 : vector<4x1xf32> to vector<4x32xf32>
    %68 = arith.mulf %63, %67 : vector<4x32xf32>
    %c0_23 = arith.constant 0 : index
    %c0_24 = arith.constant 0 : index
    %69 = vector.load %arg3[%c0_23, %c0_24] : memref<4x1xf32, #tpu.memory_space<vmem>>, vector<4x1xf32>
    %70 = vector.broadcast %69 : vector<4x1xf32> to vector<4x32xf32>
    %71 = arith.mulf %68, %70 : vector<4x32xf32>
    %c0_25 = arith.constant 0 : index
    %c0_26 = arith.constant 0 : index
    %72 = vector.load %arg4[%c0_25, %c0_26] : memref<4x1xf32, #tpu.memory_space<vmem>>, vector<4x1xf32>
    %73 = vector.broadcast %72 : vector<4x1xf32> to vector<4x32xf32>
    %74 = arith.addf %71, %73 : vector<4x32xf32>
    %cst_27 = arith.constant 0.000000e+00 : f32
    %75 = vector.broadcast %cst_27 : f32 to vector<4x32xf32>
    %76 = arith.maximumf %74, %75 : vector<4x32xf32>
    %77 = vector.extract_strided_slice %76 {offsets = [0, 0], sizes = [4, 31], strides = [1, 1]} : vector<4x32xf32> to vector<4x31xf32>
    %c0_28 = arith.constant 0 : index
    %c1_29 = arith.constant 1 : index
    %78 = vector.load %arg10[%c0_28, %c1_29] : memref<24x32xf32, #tpu.memory_space<vmem>>, vector<4x31xf32>
    tpu.vector_store %arg10[%c0_28, %c1_29], %77 {strides = array<i32>} : memref<24x32xf32, #tpu.memory_space<vmem>>, vector<4x31xf32>,
    %c8_30 = arith.constant 8 : index
    %c0_31 = arith.constant 0 : index
    %79 = vector.load %arg10[%c8_30, %c0_31] : memref<24x32xf32, #tpu.memory_space<vmem>>, vector<4x32xf32>
    tpu.vector_store %arg10[%c8_30, %c0_31], %76 {strides = array<i32>} : memref<24x32xf32, #tpu.memory_space<vmem>>, vector<4x32xf32>,
    %80 = vector.extract_strided_slice %76 {offsets = [0, 1], sizes = [4, 31], strides = [1, 1]} : vector<4x32xf32> to vector<4x31xf32>
    %c16_32 = arith.constant 16 : index
    %c0_33 = arith.constant 0 : index
    %81 = vector.load %arg10[%c16_32, %c0_33] : memref<24x32xf32, #tpu.memory_space<vmem>>, vector<4x31xf32>
    tpu.vector_store %arg10[%c16_32, %c0_33], %80 {strides = array<i32>} : memref<24x32xf32, #tpu.memory_space<vmem>>, vector<4x31xf32>,
    %c0_34 = arith.constant 0 : index
    %c0_35 = arith.constant 0 : index
    %82 = vector.load %arg10[%c0_34, %c0_35] : memref<24x32xf32, #tpu.memory_space<vmem>>, vector<24x32xf32>
    %cst_36 = arith.constant 0.000000e+00 : f32
    %83 = vector.broadcast %cst_36 : f32 to vector<24x32xf32>
    %84 = arith.select %36, %83, %82 : vector<24x32xi1>, vector<24x32xf32>
    %c0_37 = arith.constant 0 : index
    %c0_38 = arith.constant 0 : index
    %85 = vector.load %arg5[%c0_37, %c0_38] : memref<4x24xf32, #tpu.memory_space<vmem>>, vector<4x24xf32>
    %cst_39 = arith.constant dense<0.000000e+00> : vector<4x32xf32>
    %86 = tpu.matmul %85, %84, %cst_39 {dimension_numbers = #tpu.dot_dimension_numbers<[1], [0], [0], [1], [0, 0, 1, 1], [], []>} : vector<4x24xf32>, vector<24x32xf32>, vector<4x32xf32> -> vector<4x32xf32>
    %c0_40 = arith.constant 0 : index
    %c0_41 = arith.constant 0 : index
    %87 = vector.load %arg6[%c0_40, %c0_41] : memref<4x1xf32, #tpu.memory_space<vmem>>, vector<4x1xf32>
    %88 = vector.broadcast %87 : vector<4x1xf32> to vector<4x32xf32>
    %89 = arith.addf %86, %88 : vector<4x32xf32>
    %cst_42 = arith.constant dense<0.000000e+00> : vector<4xf32>
    %90 = vector.multi_reduction <add>, %89, %cst_42 [1] : vector<4x32xf32> to vector<4xf32>
    %91 = vector.shape_cast %90 : vector<4xf32> to vector<4x1xf32>
    %92 = arith.mulf %89, %89 : vector<4x32xf32>
    %cst_43 = arith.constant dense<0.000000e+00> : vector<4xf32>
    %93 = vector.multi_reduction <add>, %92, %cst_43 [1] : vector<4x32xf32> to vector<4xf32>
    %94 = vector.shape_cast %93 : vector<4xf32> to vector<4x1xf32>
    %cst_44 = arith.constant 3.125000e-02 : f32
    %95 = vector.broadcast %cst_44 : f32 to vector<4x1xf32>
    %96 = arith.mulf %91, %95 : vector<4x1xf32>
    %cst_45 = arith.constant 3.125000e-02 : f32
    %97 = vector.broadcast %cst_45 : f32 to vector<4x1xf32>
    %98 = arith.mulf %94, %97 : vector<4x1xf32>
    %99 = arith.mulf %96, %96 : vector<4x1xf32>
    %100 = arith.subf %98, %99 : vector<4x1xf32>
    %101 = vector.broadcast %96 : vector<4x1xf32> to vector<4x32xf32>
    %102 = arith.subf %89, %101 : vector<4x32xf32>
    %cst_46 = arith.constant 9.99999974E-6 : f32
    %103 = vector.broadcast %cst_46 : f32 to vector<4x1xf32>
    %104 = arith.addf %100, %103 : vector<4x1xf32>
    %105 = math.rsqrt %104 : vector<4x1xf32>
    %106 = vector.broadcast %105 : vector<4x1xf32> to vector<4x32xf32>
    %107 = arith.mulf %102, %106 : vector<4x32xf32>
    %c0_47 = arith.constant 0 : index
    %c0_48 = arith.constant 0 : index
    %108 = vector.load %arg7[%c0_47, %c0_48] : memref<4x1xf32, #tpu.memory_space<vmem>>, vector<4x1xf32>
    %109 = vector.broadcast %108 : vector<4x1xf32> to vector<4x32xf32>
    %110 = arith.mulf %107, %109 : vector<4x32xf32>
    %c0_49 = arith.constant 0 : index
    %c0_50 = arith.constant 0 : index
    %111 = vector.load %arg8[%c0_49, %c0_50] : memref<4x1xf32, #tpu.memory_space<vmem>>, vector<4x1xf32>
    %112 = vector.broadcast %111 : vector<4x1xf32> to vector<4x32xf32>
    %113 = arith.addf %110, %112 : vector<4x32xf32>
    %114 = arith.addf %113, %37 : vector<4x32xf32>
    %cst_51 = arith.constant 0.000000e+00 : f32
    %115 = vector.broadcast %cst_51 : f32 to vector<4x32xf32>
    %116 = arith.maximumf %114, %115 : vector<4x32xf32>
    %c0_52 = arith.constant 0 : index
    %c0_53 = arith.constant 0 : index
    %117 = vector.load %arg9[%c0_52, %c0_53] : memref<4x32xf32, #tpu.memory_space<vmem>>, vector<4x32xf32>
    tpu.vector_store %arg9[%c0_52, %c0_53], %116 {strides = array<i32>} : memref<4x32xf32, #tpu.memory_space<vmem>>, vector<4x32xf32>,
    return
  }
}

</mosaic_0001>

<llo_original>
// kernel: tpu_custom_call.1
$region0: #{tpu_custom_call.1}
  #allocation0 [shape = 'u32[]', space=smem, size = 0x4, offset = 0x4, fixed_abs, tag = 'smem constant byte address 0x4 - core index']
  #allocation1 [shape = 'u32[144,128]{1,0:T(1,128)}', space=vmem, size = 0x12000, scoped, tag = 'internal scratch']
  #allocation2 [shape = 'f32[24,32]{1,0:T(8,128)}', space=vmem, size = 0x3000, scoped, tag = 'scratch operand']
  %s0 = inlined_call_operand.vmem [shape: f32[4,32], index: 0, kind: input, shape index: {}]
  %s1 = inlined_call_operand.vmem [shape: f32[4,24], index: 1, kind: input, shape index: {}]
  %s2 = inlined_call_operand.vmem [shape: f32[4,1], index: 2, kind: input, shape index: {}]
  %s3 = inlined_call_operand.vmem [shape: f32[4,1], index: 3, kind: input, shape index: {}]
  %s4 = inlined_call_operand.vmem [shape: f32[4,1], index: 4, kind: input, shape index: {}]
  %s5 = inlined_call_operand.vmem [shape: f32[4,24], index: 5, kind: input, shape index: {}]
  %s6 = inlined_call_operand.vmem [shape: f32[4,1], index: 6, kind: input, shape index: {}]
  %s7 = inlined_call_operand.vmem [shape: f32[4,1], index: 7, kind: input, shape index: {}]
  %s8 = inlined_call_operand.vmem [shape: f32[4,1], index: 8, kind: input, shape index: {}]
  %s9 = inlined_call_operand.hbm [shape: f32[4,32], index: 9, kind: output, shape index: {}]
  %s10 = sld [smem:[#allocation0]]
  $region46: #{tpu_custom_call.1} parent=0
    _
  %s12 = ssub.s32 1, %s10
  %s13 = scalar_select 0, %s12, %s10
  $region1: #{tpu_custom_call.1} parent=0
    #allocation3 [shape = 'u8[2048]{0}', space=vmem, size = 0x800, scoped, tag = 'output window, operand 0, single buffered']
    #allocation4 [shape = 's32[1]{0}', space=sflag, size = 0x4, scoped, tag = 'scoped memory for tpu_custom_call.1']
    %14 = vsyncpa [#allocation4], 0
    // Predicated region
    $region2: #{tpu_custom_call.1} parent=1 // pred_check
      _
    $region3: #{tpu_custom_call.1} parent=1 // pred_check_branch
      %16 = sbr.rel (0) target = $region5
    $region4: #{tpu_custom_call.1} parent=1 // pred_region
      _
    $region5: #{tpu_custom_call.1} parent=1 // pred_fallthru
      _
    // Predicated region
    $region6: #{tpu_custom_call.1} parent=1 // pred_check
      _
    $region7: #{tpu_custom_call.1} parent=1 // pred_check_branch
      %18 = sbr.rel (0) target = $region9
    $region8: #{tpu_custom_call.1} parent=1 // pred_region
      _
    $region9: #{tpu_custom_call.1} parent=1 // pred_fallthru
      _
    // Predicated region
    $region10: #{tpu_custom_call.1} parent=1 // pred_check
      _
    $region11: #{tpu_custom_call.1} parent=1 // pred_check_branch
      %20 = sbr.rel (0) target = $region13
    $region12: #{tpu_custom_call.1} parent=1 // pred_region
      _
    $region13: #{tpu_custom_call.1} parent=1 // pred_fallthru
      _
    // Predicated region
    $region14: #{tpu_custom_call.1} parent=1 // pred_check
      _
    $region15: #{tpu_custom_call.1} parent=1 // pred_check_branch
      %22 = sbr.rel (0) target = $region17
    $region16: #{tpu_custom_call.1} parent=1 // pred_region
      _
    $region17: #{tpu_custom_call.1} parent=1 // pred_fallthru
      _
    // Predicated region
    $region18: #{tpu_custom_call.1} parent=1 // pred_check
      _
    $region19: #{tpu_custom_call.1} parent=1 // pred_check_branch
      %24 = sbr.rel (0) target = $region21
    $region20: #{tpu_custom_call.1} parent=1 // pred_region
      _
    $region21: #{tpu_custom_call.1} parent=1 // pred_fallthru
      _
    // Predicated region
    $region22: #{tpu_custom_call.1} parent=1 // pred_check
      _
    $region23: #{tpu_custom_call.1} parent=1 // pred_check_branch
      %26 = sbr.rel (0) target = $region25
    $region24: #{tpu_custom_call.1} parent=1 // pred_region
      _
    $region25: #{tpu_custom_call.1} parent=1 // pred_fallthru
      _
    // Predicated region
    $region26: #{tpu_custom_call.1} parent=1 // pred_check
      _
    $region27: #{tpu_custom_call.1} parent=1 // pred_check_branch
      %28 = sbr.rel (0) target = $region29
    $region28: #{tpu_custom_call.1} parent=1 // pred_region
      _
    $region29: #{tpu_custom_call.1} parent=1 // pred_fallthru
      _
    // Predicated region
    $region30: #{tpu_custom_call.1} parent=1 // pred_check
      _
    $region31: #{tpu_custom_call.1} parent=1 // pred_check_branch
      %30 = sbr.rel (0) target = $region33
    $region32: #{tpu_custom_call.1} parent=1 // pred_region
      _
    $region33: #{tpu_custom_call.1} parent=1 // pred_fallthru
      _
    // Predicated region
    $region34: #{tpu_custom_call.1} parent=1 // pred_check
      _
    $region35: #{tpu_custom_call.1} parent=1 // pred_check_branch
      %32 = sbr.rel (0) target = $region37
    $region36: #{tpu_custom_call.1} parent=1 // pred_region
      _
    $region37: #{tpu_custom_call.1} parent=1 // pred_fallthru
      _
    %v33 = vlaneseq
    %v34 = vshrl.u32 %v33, 7
    %v35 = vadd.s32 %v34, 8
    %v36 = vadd.s32 %v34, 16
    %v37 = vlaneseq
    %v38 = vand.u32 %v37, 127
    %v39 = vcvt.s32.f32 %v38
    %v40 = vadd.f32 %v39, 0.5
    %v41 = vmul.f32 %v40, 0.0625
    %v42 = vfloor.f32 %v41
    %v43 = vmul.f32 %v42, 16.0
    %v44 = vsub.f32 %v39, %v43
    %vm45 = vcmp.ge.s32.totalorder %v34, 4
    %vm46 = vcmp.ge.s32.totalorder %v35, 4
    %vm47 = vcmp.ge.s32.totalorder %v36, 4
    %vm48 = vcmp.lt.s32.totalorder %v34, 8
    %vm49 = vcmp.lt.s32.totalorder %v35, 8
    %vm50 = vcmp.lt.s32.totalorder %v36, 8
    %vm51 = vmand %vm45, %vm48
    %vm52 = vmand %vm46, %vm49
    %vm53 = vmand %vm47, %vm50
    %vm54 = vcmp.ge.s32.totalorder %v34, 12
    %vm55 = vcmp.ge.s32.totalorder %v35, 12
    %vm56 = vcmp.ge.s32.totalorder %v36, 12
    %vm57 = vcmp.lt.s32.totalorder %v34, 16
    %vm58 = vcmp.lt.s32.totalorder %v35, 16
    %vm59 = vcmp.lt.s32.totalorder %v36, 16
    %vm60 = vmand %vm54, %vm57
    %vm61 = vmand %vm55, %vm58
    %vm62 = vmand %vm56, %vm59
    %vm63 = vmor %vm51, %vm60
    %vm64 = vmor %vm52, %vm61
    %vm65 = vmor %vm53, %vm62
    %vm66 = vcmp.ge.s32.totalorder %v34, 20
    %vm67 = vcmp.ge.s32.totalorder %v35, 20
    %vm68 = vcmp.ge.s32.totalorder %v36, 20
    %vm69 = vmor %vm63, %vm66
    %vm70 = vmor %vm64, %vm67
    %vm71 = vmor %vm65, %vm68
    %vm72 = vcmp.lt.f32.partialorder %v44, 0.5
    %vm73 = vmand %vm48, %vm72
    %vm74 = vmand %vm49, %vm72
    %vm75 = vmand %vm50, %vm72
    %vm76 = vcmp.ge.s32.totalorder %v34, 16
    %vm77 = vcmp.ge.s32.totalorder %v35, 16
    %vm78 = vcmp.ge.s32.totalorder %v36, 16
    %vm79 = vcmp.gt.f32.partialorder %v44, 14.5
    %vm80 = vmand %vm76, %vm79
    %vm81 = vmand %vm77, %vm79
    %vm82 = vmand %vm78, %vm79
    %vm83 = vmor %vm69, %vm73
    %vm84 = vmor %vm70, %vm74
    %vm85 = vmor %vm71, %vm75
    %vm86 = vmor %vm83, %vm80
    %vm87 = vmor %vm84, %vm81
    %vm88 = vmor %vm85, %vm82
    %v89 = vld [vmem:[%s0] sm:$0xf]
    %91 = vrot.lane.b32.xlu0 %v89, 1
    %v92 = vpop.permute.xlu0 %91
    %vm94 = vcmask 257032
    %95 = vst.msk [vmem:[#allocation2] sm:$0xf] %vm94, %v92
    %vm96 = vcmask 257024
    %97 = vst.msk [vmem:[#allocation2 + $0x8] sm:$0xf] %vm96, %v89
    %98 = vrot.lane.b32.xlu0 %v89, 127
    %v99 = vpop.permute.xlu0 %98
    %vm101 = vcmask 248832
    %102 = vst.msk [vmem:[#allocation2 + $0x10] sm:$0xf] %vm101, %v99
    %v103 = vld [vmem:[#allocation2] sm:$0xff]
    %v104 = vld [vmem:[#allocation2 + $0x8] sm:$0xff]
    %v105 = vld [vmem:[#allocation2 + $0x10] sm:$0xff]
    %v106 = vsel %vm86, 0.0, %v103
    %v107 = vsel %vm87, 0.0, %v104
    %v108 = vsel %vm88, 0.0, %v105
    %v109 = vld [vmem:[%s1] sm:$0xf]
    %v110 = vld [vmem:[%s2] sm:$0xf]
    %112 = vset.pattern.permute.xlu0 0
    %113 = vperm.xlu0 %112, %v110
    %v114 = vpop.permute.xlu0 %113
    %vm116 = vcmask 195584
    %v118 = vsel %vm116, %v109, 0
    %120 = vmatprep.subr.mxu0 0.0
    %121 = vmatpush1.msra.mxu0 %v106
    %122 = vmatprep.subr.mxu0 0.0
    %123 = vmatpush1.msra.mxu0 %v107
    %124 = vmatprep.subr.mxu0 0.0
    %125 = vmatpush1.msra.mxu0 %v108
    %126 = vmatprep.subr.mxu0 0.0
    %127 = vmatpush1.msra.mxu0 0.0
    %128 = vmatprep.subr.mxu0 0.0
    %129 = vmatpush1.msra.mxu0 0.0
    %130 = vmatprep.subr.mxu0 0.0
    %131 = vmatpush1.msra.mxu0 0.0
    %132 = vmatprep.subr.mxu0 0.0
    %133 = vmatpush1.msra.mxu0 0.0
    %134 = vmatprep.subr.mxu0 0.0
    %135 = vmatpush1.msra.mxu0 0.0
    %136 = vmatprep.subr.mxu0 0.0
    %137 = vmatpush1.msra.mxu0 0.0
    %138 = vmatprep.subr.mxu0 0.0
    %139 = vmatpush1.msra.mxu0 0.0
    %140 = vmatprep.subr.mxu0 0.0
    %141 = vmatpush1.msra.mxu0 0.0
    %142 = vmatprep.subr.mxu0 0.0
    %143 = vmatpush1.msra.mxu0 0.0
    %144 = vmatprep.subr.mxu0 0.0
    %145 = vmatpush1.msra.mxu0 0.0
    %146 = vmatprep.subr.mxu0 0.0
    %147 = vmatpush1.msra.mxu0 0.0
    %148 = vmatprep.subr.mxu0 0.0
    %149 = vmatpush1.msra.mxu0 0.0
    %150 = vmatprep.subr.mxu0 0.0
    %151 = vmatpush1.msra.mxu0 0.0
    %152 = vmatprep.subr.mxu0 0.0
    %153 = vmatpush1.msra.mxu0 0.0
    %154 = vmatprep.subr.mxu0 0.0
    %155 = vmatpush1.msra.mxu0 0.0
    %156 = vmatprep.subr.mxu0 0.0
    %157 = vmatpush1.msra.mxu0 0.0
    %158 = vmatprep.subr.mxu0 0.0
    %159 = vmatpush1.msra.mxu0 0.0
    %160 = vmatprep.subr.mxu0 0.0
    %161 = vmatpush1.msra.mxu0 0.0
    %162 = vmatprep.subr.mxu0 0.0
    %163 = vmatpush1.msra.mxu0 0.0
    %164 = vmatprep.subr.mxu0 0.0
    %165 = vmatpush1.msra.mxu0 0.0
    %166 = vmatprep.subr.mxu0 0.0
    %167 = vmatpush1.msra.mxu0 0.0
    %168 = vmatprep.subr.mxu0 0.0
    %169 = vmatpush1.msra.mxu0 0.0
    %170 = vmatprep.subr.mxu0 0.0
    %171 = vmatpush1.msra.mxu0 0.0
    %172 = vmatprep.subr.mxu0 0.0
    %173 = vmatpush1.msra.mxu0 0.0
    %174 = vmatprep.subr.mxu0 0.0
    %175 = vmatpush1.msra.mxu0 0.0
    %176 = vmatprep.subr.mxu0 0.0
    %177 = vmatpush1.msra.mxu0 0.0
    %178 = vmatprep.subr.mxu0 0.0
    %179 = vmatpush1.msra.mxu0 0.0
    %180 = vmatprep.subr.mxu0 0.0
    %181 = vmatpush1.msra.mxu0 0.0
    %182 = vmatprep.subr.mxu0 0.0
    %183 = vmatpush1.msra.mxu0 0.0
    %184 = vmatprep.mubr.f32.mxu0 0.0
    %185 = vmatmul.mubr.f32.gmra.mrb[0].mxu0 %v118
    %v186 = vpop.f32.mrb[0].mxu0
    %v187 = vadd.f32 %v114, %v186
    %v188 = vpop.f32.mrb[0].mxu0
    %189 = vdwg.mxu0
    %v190 = vsel %vm96, %v187, 0.0
    %191 = vadd.xlane.f32.xlu0 %v190
    %v192 = vpop.xlane.xlu0 %191
    %v193 = vmul.f32 %v187, %v187
    %v194 = vsel %vm96, %v193, 0.0
    %195 = vadd.xlane.f32.xlu0 %v194
    %v196 = vpop.xlane.xlu0 %195
    %v197 = vmul.f32 %v192, 0.03125
    %v198 = vmul.f32 %v196, 0.03125
    %v199 = vmul.f32 %v197, %v197
    %v200 = vsub.f32 %v198, %v199
    %v201 = vsub.f32 %v187, %v197
    %v202 = vadd.f32 %v200, 1e-05
    %v203 = vrsqrt.pop %v202
    %v204 = vmul.f32 %v201, %v203
    %v205 = vld [vmem:[%s3] sm:$0xf]
    %207 = vset.pattern.permute.xlu0 0
    %208 = vperm.xlu0 %207, %v205
    %v209 = vpop.permute.xlu0 %208
    %v211 = vmul.f32 %v204, %v209
    %v212 = vld [vmem:[%s4] sm:$0xf]
    %214 = vset.pattern.permute.xlu0 0
    %215 = vperm.xlu0 %214, %v212
    %v216 = vpop.permute.xlu0 %215
    %v218 = vadd.f32 %v211, %v216
    %v219 = vmax.f32 %v218, 0.0
    %221 = vrot.lane.b32.xlu0 %v219, 1
    %v222 = vpop.permute.xlu0 %221
    %224 = vst.msk [vmem:[#allocation2] sm:$0xf] %vm94, %v222
    %225 = vst.msk [vmem:[#allocation2 + $0x8] sm:$0xf] %vm96, %v219
    %226 = vrot.lane.b32.xlu0 %v219, 127
    %v227 = vpop.permute.xlu0 %226
    %229 = vst.msk [vmem:[#allocation2 + $0x10] sm:$0xf] %vm101, %v227
    %v230 = vld [vmem:[#allocation2] sm:$0xff]
    %v231 = vld [vmem:[#allocation2 + $0x8] sm:$0xff]
    %v232 = vld [vmem:[#allocation2 + $0x10] sm:$0xff]
    %v233 = vsel %vm86, 0.0, %v230
    %v234 = vsel %vm87, 0.0, %v231
    %v235 = vsel %vm88, 0.0, %v232
    %v236 = vld [vmem:[%s5] sm:$0xf]
    %v237 = vld [vmem:[%s6] sm:$0xf]
    %239 = vset.pattern.permute.xlu0 0
    %240 = vperm.xlu0 %239, %v237
    %v241 = vpop.permute.xlu0 %240
    %v244 = vsel %vm116, %v236, 0
    %246 = vmatprep.subr.mxu0 0.0
    %247 = vmatpush1.msra.mxu0 %v233
    %248 = vmatprep.subr.mxu0 0.0
    %249 = vmatpush1.msra.mxu0 %v234
    %250 = vmatprep.subr.mxu0 0.0
    %251 = vmatpush1.msra.mxu0 %v235
    %252 = vmatprep.subr.mxu0 0.0
    %253 = vmatpush1.msra.mxu0 0.0
    %254 = vmatprep.subr.mxu0 0.0
    %255 = vmatpush1.msra.mxu0 0.0
    %256 = vmatprep.subr.mxu0 0.0
    %257 = vmatpush1.msra.mxu0 0.0
    %258 = vmatprep.subr.mxu0 0.0
    %259 = vmatpush1.msra.mxu0 0.0
    %260 = vmatprep.subr.mxu0 0.0
    %261 = vmatpush1.msra.mxu0 0.0
    %262 = vmatprep.subr.mxu0 0.0
    %263 = vmatpush1.msra.mxu0 0.0
    %264 = vmatprep.subr.mxu0 0.0
    %265 = vmatpush1.msra.mxu0 0.0
    %266 = vmatprep.subr.mxu0 0.0
    %267 = vmatpush1.msra.mxu0 0.0
    %268 = vmatprep.subr.mxu0 0.0
    %269 = vmatpush1.msra.mxu0 0.0
    %270 = vmatprep.subr.mxu0 0.0
    %271 = vmatpush1.msra.mxu0 0.0
    %272 = vmatprep.subr.mxu0 0.0
    %273 = vmatpush1.msra.mxu0 0.0
    %274 = vmatprep.subr.mxu0 0.0
    %275 = vmatpush1.msra.mxu0 0.0
    %276 = vmatprep.subr.mxu0 0.0
    %277 = vmatpush1.msra.mxu0 0.0
    %278 = vmatprep.subr.mxu0 0.0
    %279 = vmatpush1.msra.mxu0 0.0
    %280 = vmatprep.subr.mxu0 0.0
    %281 = vmatpush1.msra.mxu0 0.0
    %282 = vmatprep.subr.mxu0 0.0
    %283 = vmatpush1.msra.mxu0 0.0
    %284 = vmatprep.subr.mxu0 0.0
    %285 = vmatpush1.msra.mxu0 0.0
    %286 = vmatprep.subr.mxu0 0.0
    %287 = vmatpush1.msra.mxu0 0.0
    %288 = vmatprep.subr.mxu0 0.0
    %289 = vmatpush1.msra.mxu0 0.0
    %290 = vmatprep.subr.mxu0 0.0
    %291 = vmatpush1.msra.mxu0 0.0
    %292 = vmatprep.subr.mxu0 0.0
    %293 = vmatpush1.msra.mxu0 0.0
    %294 = vmatprep.subr.mxu0 0.0
    %295 = vmatpush1.msra.mxu0 0.0
    %296 = vmatprep.subr.mxu0 0.0
    %297 = vmatpush1.msra.mxu0 0.0
    %298 = vmatprep.subr.mxu0 0.0
    %299 = vmatpush1.msra.mxu0 0.0
    %300 = vmatprep.subr.mxu0 0.0
    %301 = vmatpush1.msra.mxu0 0.0
    %302 = vmatprep.subr.mxu0 0.0
    %303 = vmatpush1.msra.mxu0 0.0
    %304 = vmatprep.subr.mxu0 0.0
    %305 = vmatpush1.msra.mxu0 0.0
    %306 = vmatprep.subr.mxu0 0.0
    %307 = vmatpush1.msra.mxu0 0.0
    %308 = vmatprep.subr.mxu0 0.0
    %309 = vmatpush1.msra.mxu0 0.0
    %310 = vmatprep.mubr.f32.mxu0 0.0
    %311 = vmatmul.mubr.f32.gmra.mrb[0].mxu0 %v244
    %v312 = vpop.f32.mrb[0].mxu0
    %v313 = vadd.f32 %v241, %v312
    %v314 = vpop.f32.mrb[0].mxu0
    %315 = vdwg.mxu0
    %v316 = vsel %vm96, %v313, 0.0
    %317 = vadd.xlane.f32.xlu0 %v316
    %v318 = vpop.xlane.xlu0 %317
    %v319 = vmul.f32 %v313, %v313
    %v320 = vsel %vm96, %v319, 0.0
    %321 = vadd.xlane.f32.xlu0 %v320
    %v322 = vpop.xlane.xlu0 %321
    %v323 = vmul.f32 %v318, 0.03125
    %v324 = vmul.f32 %v322, 0.03125
    %v325 = vmul.f32 %v323, %v323
    %v326 = vsub.f32 %v324, %v325
    %v327 = vsub.f32 %v313, %v323
    %v328 = vadd.f32 %v326, 1e-05
    %v329 = vrsqrt.pop %v328
    %v330 = vmul.f32 %v327, %v329
    %v331 = vld [vmem:[%s7] sm:$0xf]
    %333 = vset.pattern.permute.xlu0 0
    %334 = vperm.xlu0 %333, %v331
    %v335 = vpop.permute.xlu0 %334
    %v337 = vmul.f32 %v330, %v335
    %v338 = vld [vmem:[%s8] sm:$0xf]
    %340 = vset.pattern.permute.xlu0 0
    %341 = vperm.xlu0 %340, %v338
    %v342 = vpop.permute.xlu0 %341
    %v344 = vadd.f32 %v337, %v342
    %v345 = vadd.f32 %v344, %v89
    %v346 = vmax.f32 %v345, 0.0
    %347 = vst.msk [vmem:[#allocation3] sm:$0xf] %vm96, %v346
    // Predicated region
    $region38: #{tpu_custom_call.1} parent=1 // pred_check
      _
    $region39: #{tpu_custom_call.1} parent=1 // pred_check_branch
      %349 = sbr.rel (0) target = $region41
    $region40: #{tpu_custom_call.1} parent=1 // pred_region
      %s351 = ssub.s32 64, 64
      %352 = vsyncadd [#allocation4], %s351
      %s354 = sshll.u32 [#allocation3], 4
      %s355 = int_to_ptr.vmem [resolvable:$true] %s354
      %357 = dma.vmem_to_hbm [thread:$0]  %s355, 64, %s9, [#allocation4]
    $region41: #{tpu_custom_call.1} parent=1 // pred_fallthru
      _
    // Predicated region
    $region42: #{tpu_custom_call.1} parent=1 // pred_check
      _
    $region43: #{tpu_custom_call.1} parent=1 // pred_check_branch
      %359 = sbr.rel (0) target = $region45
    $region44: #{tpu_custom_call.1} parent=1 // pred_region
      %360 = dma.done [#allocation4], 64
    $region45: #{tpu_custom_call.1} parent=1 // pred_fallthru
      _
    %361 = vsyncpa [#allocation4], 1

</llo_original>
